<compile_context>
chip_gen: v6e
topology: v6e:2x2x1
jax: 0.10.0
libtpu: 0.0.40
codegen_flags: <defaults>
</compile_context>

<pallas_src>
import jax
import jax.numpy as jnp
import numpy as np
from jax import lax
from jax.experimental import pallas as pl
from jax.experimental.pallas import tpu as pltpu


def _ceil_to(x, m):
    return ((x + m - 1) // m) * m


def _lovasz_kernel(d_ref, m_ref, msum_ref, rw_ref, tri_ref,
                   out_ref, carry_ref, prev_ref, acc_ref):
    k = pl.program_id(1)
    nk = pl.num_programs(1)

    @pl.when(k == 0)
    def _init():
        carry_ref[...] = jnp.zeros_like(carry_ref)   # running cumsum(m) carry
        prev_ref[...] = jnp.zeros_like(prev_ref)     # iou of previous position
        acc_ref[...] = jnp.zeros_like(acc_ref)       # lane-dense d*grad accumulator

    d = d_ref[...]                                   # (RB, TK) f32 sorted distances
    m = m_ref[...]                                   # (RB, TK) bf16 sorted masks
    msum = msum_ref[...]                             # (RB, 1)  f32 total mask sum
    _, tk = d.shape

    # Chunk-local cumulative sum via MXU (bf16 x bf16 -> f32, exact for 0/1
    # masks) plus the carry of everything before this chunk.
    cm = jnp.dot(m, tri_ref[...], preferred_element_type=jnp.float32)
    cm = cm + carry_ref[...]                         # global cumsum(m)[j]

    lane = lax.broadcasted_iota(jnp.int32, (1, tk), 1)
    pos1 = (k * tk + lane + 1).astype(jnp.float32)   # global (j + 1)

    # iou = 1 - inter/union = (union - inter)/union = pos1/union
    union = msum + pos1 - cm                         # msum + cumsum(1 - m), >= 1
    iou = pos1 * pl.reciprocal(union, approx=False)

    # Lovasz gradient: g[j] = iou[j] - iou[j-1], with iou[-1] taken from the
    # previous chunk's carry (0 at the very first position).
    prev = pltpu.roll(iou, shift=1, axis=1)
    prev = jnp.where(lane == 0, prev_ref[...], prev)
    grad = iou - prev

    acc_ref[...] += d * grad                         # lane-dense, no reduce yet
    carry_ref[...] = cm[:, tk - 1:tk]
    prev_ref[...] = iou[:, tk - 1:tk]

    @pl.when(k == nk - 1)
    def _fin():
        # single cross-lane + cross-row weighted reduction -> one partial scalar
        out_ref[0] = jnp.sum(acc_ref[...] * rw_ref[...], axis=(0, 1),
                             keepdims=True)


def lovasz_loss(inputs, targets, classes_weights, tiles_weights, config=None,
                *, row_block=256, lane_block=None):
    N, C, H, W = inputs.shape
    assert C >= 2, "Classification imply at least two Classes"
    assert len(classes_weights) == C, "Classes Weights mismatch Classes"
    P = H * W
    assert P < (1 << 24), "f32 position counter exact only below 2^24 pixels"

    if lane_block is None:
        kind = jax.devices()[0].device_kind.lower()
        lane_block = 128 if "v5" in kind else 256    # v5e MXU is 128x128
    assert lane_block % 128 == 0

    cw_full = jnp.asarray(classes_weights, jnp.float32)
    tw = jnp.asarray(tiles_weights, jnp.float32)

    # Statically drop zero-weight classes when weights are concrete: they
    # contribute exactly 0 but would otherwise pay full sort/gather/DMA cost.
    class_ids = np.arange(C)
    try:
        cw_host = np.asarray(cw_full)
        nz = np.flatnonzero(cw_host != 0.0)
        if 0 < nz.size < C:
            class_ids = nz
    except Exception:                                # traced weights: keep all
        pass
    keep = jnp.asarray(class_ids)
    Ck = len(class_ids)

    x = jnp.transpose(inputs.reshape(N, C, P), (1, 0, 2))[keep]      # (Ck, N, P)
    t = targets.reshape(N, P)
    cls = jnp.asarray(class_ids, dtype=targets.dtype)[:, None, None]
    m = (t[None, :, :] == cls).astype(jnp.float32)                   # (Ck, N, P)
    d = jnp.abs(m - x)
    cw = cw_full[keep]                                               # (Ck,)

    # Order-invariant skip-condition / weighting terms, computed once in XLA
    # and folded into one per-row weight (kept out of the hot kernel loop).
    msum = jnp.sum(m, axis=-1)                                       # (Ck, N)
    gt25 = jnp.sum((x > 0.25).astype(jnp.float32), axis=-1)          # (Ck, N)
    valid = ((msum > 0.0) | (gt25 > 0.0)) & (cw != 0.0)[:, None]     # (Ck, N)
    cnt = jnp.sum(valid.astype(jnp.float32))
    row_w = jnp.where(valid, tw[None, :] * cw[:, None], 0.0)         # (Ck, N)

    # TODO(synk): descending sort has no Pallas TPU primitive; done in XLA glue.
    # Both gathers are fused into a single take_along_axis (one index set).
    order = jnp.argsort(-d, axis=-1)
    dm = jnp.stack([d, m], axis=2)                                   # (Ck, N, 2, P)
    idx = jnp.broadcast_to(order[:, :, None, :], dm.shape)
    dm_sorted = jnp.take_along_axis(dm, idx, axis=-1)
    d_sorted = dm_sorted[:, :, 0, :]
    m_sorted = dm_sorted[:, :, 1, :]

    R = Ck * N
    tk = min(lane_block, _ceil_to(P, 128))
    p_pad = (-P) % tk

    # rb: multiple of 16 (legal bf16 sublane tile); keep >= 2 row blocks when
    # possible so megacore (v7x) can shard the parallel axis across both TCs.
    rb = max(16, min(_ceil_to(row_block, 16), _ceil_to(R, 16)))
    if rb >= R and R > 16:
        rb = _ceil_to((R + 1) // 2, 16)
    r_pad = (-R) % rb

    d2 = d_sorted.reshape(R, P)
    m2 = m_sorted.reshape(R, P)
    if p_pad:                                        # pads have d=0, m=0
        d2 = jnp.pad(d2, ((0, 0), (0, p_pad)))
        m2 = jnp.pad(m2, ((0, 0), (0, p_pad)))
    if r_pad:                                        # pad rows get weight 0
        d2 = jnp.pad(d2, ((0, r_pad), (0, 0)))
        m2 = jnp.pad(m2, ((0, r_pad), (0, 0)))
    m2 = m2.astype(jnp.bfloat16)       # exact for 0/1 masks, halves mask DMA bytes

    msum2 = jnp.pad(msum.reshape(R, 1), ((0, r_pad), (0, 0)))
    rw2 = jnp.pad(row_w.reshape(R, 1), ((0, r_pad), (0, 0)))

    R_pad, P_pad = R + r_pad, P + p_pad
    G, K = R_pad // rb, P_pad // tk

    # Upper-triangular ones (the cumsum operator), built once; constant
    # index_map keeps it resident in VMEM for the whole grid.
    tri = jnp.triu(jnp.ones((tk, tk), jnp.float32)).astype(jnp.bfloat16)

    # Actual VMEM footprint (double-buffered streams + resident scratch) with
    # headroom -- never request the whole 64 MiB a v7x TensorCore has.
    vmem_bytes = (2 * rb * tk * 4          # d tiles (f32, double-buffered)
                  + 2 * rb * tk * 2        # m tiles (bf16)
                  + 2 * tk * tk * 2        # triangular constant
                  + 2 * 2 * rb * 4         # msum + row-weight tiles
                  + rb * tk * 4            # lane-dense accumulator scratch
                  + 2 * rb * 4)            # cumsum / prev-iou carries
    vmem_limit = int(min(32 << 20, max(4 << 20, 2 * vmem_bytes)))

    partial = pl.pallas_call(
        _lovasz_kernel,
        out_shape=jax.ShapeDtypeStruct((G, 1, 1), jnp.float32),
        grid=(G, K),
        in_specs=[
            pl.BlockSpec((rb, tk), lambda i, k: (i, k)),             # d (f32)
            pl.BlockSpec((rb, tk), lambda i, k: (i, k)),             # m (bf16)
            pl.BlockSpec((rb, 1), lambda i, k: (i, 0)),              # msum
            pl.BlockSpec((rb, 1), lambda i, k: (i, 0)),              # row weights
            pl.BlockSpec((tk, tk), lambda i, k: (0, 0)),             # triangular
        ],
        out_specs=pl.BlockSpec((1, 1, 1), lambda i, k: (i, 0, 0)),
        scratch_shapes=[
            pltpu.VMEM((rb, 1), jnp.float32),   # cumsum carry
            pltpu.VMEM((rb, 1), jnp.float32),   # previous-iou carry
            pltpu.VMEM((rb, tk), jnp.float32),  # lane-dense dot accumulator
        ],
        compiler_params=pltpu.CompilerParams(
            dimension_semantics=("parallel", "arbitrary"),
            vmem_limit_bytes=vmem_limit,
        ),
    )(d2, m2, msum2, rw2, tri)

    return jnp.sum(partial) / N / cnt


def lovasz_reference(inputs, targets, classes_weights, tiles_weights):
    """Plain-JAX reference mirroring the PyTorch module (for verification)."""
    N, C, H, W = inputs.shape
    P = H * W
    x = jnp.transpose(inputs.reshape(N, C, P), (1, 0, 2))            # (C, N, P)
    t = targets.reshape(N, P)
    cls = jnp.arange(C, dtype=targets.dtype)[:, None, None]
    m = (t[None] == cls).astype(jnp.float32)
    d = jnp.abs(m - x)
    order = jnp.argsort(-d, axis=-1)
    ds = jnp.take_along_axis(d, order, axis=-1)
    ms = jnp.take_along_axis(m, order, axis=-1)
    msum = ms.sum(-1, keepdims=True)
    cm = jnp.cumsum(ms, axis=-1)
    c1m = jnp.cumsum(1.0 - ms, axis=-1)
    iou = 1.0 - (msum - cm) / (msum + c1m)
    grad = jnp.concatenate([iou[..., :1], iou[..., 1:] - iou[..., :-1]], axis=-1)
    per = (ds * grad).sum(-1)                                        # (C, N)
    gt25 = (x > 0.25).sum(-1)
    cw = jnp.asarray(classes_weights, jnp.float32)
    tw = jnp.asarray(tiles_weights, jnp.float32)
    valid = ((m.sum(-1) > 0) | (gt25 > 0)) & (cw != 0.0)[:, None]
    loss = jnp.where(valid, per * tw[None, :] * cw[:, None], 0.0).sum()
    cnt = valid.sum()
    return loss / N / cnt


if __name__ == "__main__":
    key = jax.random.PRNGKey(0)
    k1, k2, k3, k4 = jax.random.split(key, 4)

    # Case 1: small shape with one zero-weight class (exercises the static
    # class-dropping path; R=6 -> single row block).
    N, C, H, W = 2, 4, 16, 16
    inputs = jax.random.uniform(k1, (N, C, H, W), jnp.float32)       # probabilities
    targets = jax.random.randint(k2, (N, H, W), 0, C, jnp.int32)     # class labels
    classes_weights = jnp.array([1.0, 0.8, 0.6, 0.0], jnp.float32)
    tiles_weights = jnp.array([1.0, 0.5], jnp.float32)

    ref = lovasz_reference(inputs, targets, classes_weights, tiles_weights)
    # lane_block=128 -> 2 chunks along the sorted axis (exercises the cumsum /
    # prev-iou carries); lane_block=256 -> single chunk.
    for lb in (128, 256):
        loss = lovasz_loss(inputs, targets, classes_weights, tiles_weights,
                           config=None, lane_block=lb)
        loss = jax.block_until_ready(loss)
        np.testing.assert_allclose(np.asarray(loss), np.asarray(ref),
                                   rtol=1e-5, atol=1e-5)

    # Case 2: more rows (R=24 -> >=2 row blocks, exercises the parallel row
    # axis / multi-block path), all classes weighted.
    N2, C2 = 3, 8
    inputs2 = jax.random.uniform(k3, (N2, C2, H, W), jnp.float32)
    targets2 = jax.random.randint(k4, (N2, H, W), 0, C2, jnp.int32)
    cw2 = jnp.linspace(0.2, 1.0, C2).astype(jnp.float32)
    tw2 = jnp.array([1.0, 0.5, 0.75], jnp.float32)

    ref2 = lovasz_reference(inputs2, targets2, cw2, tw2)
    loss2 = lovasz_loss(inputs2, targets2, cw2, tw2, config=None)
    loss2 = jax.block_until_ready(loss2)
    np.testing.assert_allclose(np.asarray(loss2), np.asarray(ref2),
                               rtol=1e-5, atol=1e-5)

    print("KERNEL_OK")
</pallas_src>

<mosaic_0001>
module attributes {stable_mosaic.version = 11 : i64} {
  func.func @_lovasz_kernel(%arg0: i32, %arg1: i32, %arg2: memref<16x128xf32, #tpu.memory_space<vmem>>, %arg3: memref<16x128xbf16, #tpu.memory_space<vmem>>, %arg4: memref<16x1xf32, #tpu.memory_space<vmem>>, %arg5: memref<16x1xf32, #tpu.memory_space<vmem>>, %arg6: memref<128x128xbf16, #tpu.memory_space<vmem>>, %arg7: memref<1x1x1xf32, #tpu.memory_space<vmem>>, %arg8: memref<16x1xf32, #tpu.memory_space<vmem>>, %arg9: memref<16x1xf32, #tpu.memory_space<vmem>>, %arg10: memref<16x128xf32, #tpu.memory_space<vmem>>) attributes {dimension_semantics = [#tpu.dimension_semantics<parallel>, #tpu.dimension_semantics<arbitrary>], iteration_bounds = array<i64: 1, 2>, scalar_prefetch = 0 : i64, scratch_operands = 3 : i64, tpu.core_type = #tpu.core_type<tc>, window_params = [{transform_indices = @transform_0, window_bounds = array<i64: 16, 128>}, {transform_indices = @transform_1, window_bounds = array<i64: 16, 128>}, {transform_indices = @transform_2, window_bounds = array<i64: 16, 1>}, {transform_indices = @transform_3, window_bounds = array<i64: 16, 1>}, {pipeline_mode = #tpu.pipeline_mode<synchronous>, transform_indices = @transform_4, window_bounds = array<i64: 128, 128>}, {transform_indices = @transform_5, window_bounds = array<i64: 1, 1, 1>}]} {
    %c0_i32 = arith.constant 0 : i32
    %0 = arith.cmpi eq, %arg1, %c0_i32 : i32
    %1 = arith.extui %0 : i1 to i32
    %c0_i32_0 = arith.constant 0 : i32
    %2 = arith.cmpi ne, %1, %c0_i32_0 : i32
    scf.if %2 {
      %cst_24 = arith.constant 0.000000e+00 : f32
      %46 = vector.broadcast %cst_24 : f32 to vector<16x1xf32>
      %c0_25 = arith.constant 0 : index
      %c0_26 = arith.constant 0 : index
      %47 = vector.load %arg8[%c0_25, %c0_26] : memref<16x1xf32, #tpu.memory_space<vmem>>, vector<16x1xf32>
      tpu.vector_store %arg8[%c0_25, %c0_26], %46 {strides = array<i32>} : memref<16x1xf32, #tpu.memory_space<vmem>>, vector<16x1xf32>,
      %cst_27 = arith.constant 0.000000e+00 : f32
      %48 = vector.broadcast %cst_27 : f32 to vector<16x1xf32>
      %c0_28 = arith.constant 0 : index
      %c0_29 = arith.constant 0 : index
      %49 = vector.load %arg9[%c0_28, %c0_29] : memref<16x1xf32, #tpu.memory_space<vmem>>, vector<16x1xf32>
      tpu.vector_store %arg9[%c0_28, %c0_29], %48 {strides = array<i32>} : memref<16x1xf32, #tpu.memory_space<vmem>>, vector<16x1xf32>,
      %cst_30 = arith.constant 0.000000e+00 : f32
      %50 = vector.broadcast %cst_30 : f32 to vector<16x128xf32>
      %c0_31 = arith.constant 0 : index
      %c0_32 = arith.constant 0 : index
      %51 = vector.load %arg10[%c0_31, %c0_32] : memref<16x128xf32, #tpu.memory_space<vmem>>, vector<16x128xf32>
      tpu.vector_store %arg10[%c0_31, %c0_32], %50 {strides = array<i32>} : memref<16x128xf32, #tpu.memory_space<vmem>>, vector<16x128xf32>,
    } else {
    }
    %c0 = arith.constant 0 : index
    %c0_1 = arith.constant 0 : index
    %3 = vector.load %arg2[%c0, %c0_1] : memref<16x128xf32, #tpu.memory_space<vmem>>, vector<16x128xf32>
    %c0_2 = arith.constant 0 : index
    %c0_3 = arith.constant 0 : index
    %4 = vector.load %arg3[%c0_2, %c0_3] : memref<16x128xbf16, #tpu.memory_space<vmem>>, vector<16x128xbf16>
    %c0_4 = arith.constant 0 : index
    %c0_5 = arith.constant 0 : index
    %5 = vector.load %arg4[%c0_4, %c0_5] : memref<16x1xf32, #tpu.memory_space<vmem>>, vector<16x1xf32>
    %c0_6 = arith.constant 0 : index
    %c0_7 = arith.constant 0 : index
    %6 = vector.load %arg6[%c0_6, %c0_7] : memref<128x128xbf16, #tpu.memory_space<vmem>>, vector<128x128xbf16>
    %cst = arith.constant dense<0.000000e+00> : vector<16x128xf32>
    %7 = tpu.matmul %4, %6, %cst {dimension_numbers = #tpu.dot_dimension_numbers<[1], [0], [0], [1], [0, 0, 1, 1], [], []>} : vector<16x128xbf16>, vector<128x128xbf16>, vector<16x128xf32> -> vector<16x128xf32>
    %c0_8 = arith.constant 0 : index
    %c0_9 = arith.constant 0 : index
    %8 = vector.load %arg8[%c0_8, %c0_9] : memref<16x1xf32, #tpu.memory_space<vmem>>, vector<16x1xf32>
    %9 = vector.broadcast %8 : vector<16x1xf32> to vector<16x128xf32>
    %10 = arith.addf %7, %9 : vector<16x128xf32>
    %11 = tpu.iota {dimensions = array<i32: 1>} : vector<1x128xi32>
    %c128_i32 = arith.constant 128 : i32
    %12 = arith.muli %arg1, %c128_i32 : i32
    %13 = vector.broadcast %12 : i32 to vector<1x128xi32>
    %14 = arith.addi %13, %11 : vector<1x128xi32>
    %c1_i32 = arith.constant 1 : i32
    %15 = vector.broadcast %c1_i32 : i32 to vector<1x128xi32>
    %16 = arith.addi %14, %15 : vector<1x128xi32>
    %17 = arith.sitofp %16 : vector<1x128xi32> to vector<1x128xf32>
    %18 = vector.broadcast %5 : vector<16x1xf32> to vector<16x128xf32>
    %19 = vector.broadcast %17 : vector<1x128xf32> to vector<16x128xf32>
    %20 = arith.addf %18, %19 : vector<16x128xf32>
    %21 = arith.subf %20, %10 : vector<16x128xf32>
    %22 = tpu.reciprocal %21 : vector<16x128xf32> -> vector<16x128xf32>
    %23 = vector.broadcast %17 : vector<1x128xf32> to vector<16x128xf32>
    %24 = arith.mulf %23, %22 : vector<16x128xf32>
    %c1_i32_10 = arith.constant 1 : i32
    %25 = tpu.dynamic_rotate %24 by %c1_i32_10 dim 1 : vector<16x128xf32>, i32 -> vector<16x128xf32>
    %c0_i32_11 = arith.constant 0 : i32
    %26 = vector.broadcast %c0_i32_11 : i32 to vector<1x128xi32>
    %27 = arith.cmpi eq, %11, %26 : vector<1x128xi32>
    %c0_12 = arith.constant 0 : index
    %c0_13 = arith.constant 0 : index
    %28 = vector.load %arg9[%c0_12, %c0_13] : memref<16x1xf32, #tpu.memory_space<vmem>>, vector<16x1xf32>
    %29 = vector.shape_cast %27 : vector<1x128xi1> to vector<1x128xi1>
    %30 = vector.broadcast %29 : vector<1x128xi1> to vector<16x128xi1>
    %31 = vector.shape_cast %28 : vector<16x1xf32> to vector<16x1xf32>
    %32 = vector.broadcast %31 : vector<16x1xf32> to vector<16x128xf32>
    %33 = arith.select %30, %32, %25 : vector<16x128xi1>, vector<16x128xf32>
    %34 = arith.subf %24, %33 : vector<16x128xf32>
    %c0_14 = arith.constant 0 : index
    %c0_15 = arith.constant 0 : index
    %35 = vector.load %arg10[%c0_14, %c0_15] : memref<16x128xf32, #tpu.memory_space<vmem>>, vector<16x128xf32>
    %36 = arith.mulf %3, %34 : vector<16x128xf32>
    %37 = arith.addf %35, %36 : vector<16x128xf32>
    %c0_16 = arith.constant 0 : index
    %c0_17 = arith.constant 0 : index
    %38 = vector.load %arg10[%c0_16, %c0_17] : memref<16x128xf32, #tpu.memory_space<vmem>>, vector<16x128xf32>
    tpu.vector_store %arg10[%c0_16, %c0_17], %37 {strides = array<i32>} : memref<16x128xf32, #tpu.memory_space<vmem>>, vector<16x128xf32>,
    %39 = vector.extract_strided_slice %10 {offsets = [0, 127], sizes = [16, 1], strides = [1, 1]} : vector<16x128xf32> to vector<16x1xf32>
    %c0_18 = arith.constant 0 : index
    %c0_19 = arith.constant 0 : index
    %40 = vector.load %arg8[%c0_18, %c0_19] : memref<16x1xf32, #tpu.memory_space<vmem>>, vector<16x1xf32>
    tpu.vector_store %arg8[%c0_18, %c0_19], %39 {strides = array<i32>} : memref<16x1xf32, #tpu.memory_space<vmem>>, vector<16x1xf32>,
    %41 = vector.extract_strided_slice %24 {offsets = [0, 127], sizes = [16, 1], strides = [1, 1]} : vector<16x128xf32> to vector<16x1xf32>
    %c0_20 = arith.constant 0 : index
    %c0_21 = arith.constant 0 : index
    %42 = vector.load %arg9[%c0_20, %c0_21] : memref<16x1xf32, #tpu.memory_space<vmem>>, vector<16x1xf32>
    tpu.vector_store %arg9[%c0_20, %c0_21], %41 {strides = array<i32>} : memref<16x1xf32, #tpu.memory_space<vmem>>, vector<16x1xf32>,
    %c1_i32_22 = arith.constant 1 : i32
    %43 = arith.cmpi eq, %arg1, %c1_i32_22 : i32
    %44 = arith.extui %43 : i1 to i32
    %c0_i32_23 = arith.constant 0 : i32
    %45 = arith.cmpi ne, %44, %c0_i32_23 : i32
    scf.if %45 {
      %c0_24 = arith.constant 0 : index
      %c0_25 = arith.constant 0 : index
      %46 = vector.load %arg10[%c0_24, %c0_25] : memref<16x128xf32, #tpu.memory_space<vmem>>, vector<16x128xf32>
      %c0_26 = arith.constant 0 : index
      %c0_27 = arith.constant 0 : index
      %47 = vector.load %arg5[%c0_26, %c0_27] : memref<16x1xf32, #tpu.memory_space<vmem>>, vector<16x1xf32>
      %48 = vector.broadcast %47 : vector<16x1xf32> to vector<16x128xf32>
      %49 = arith.mulf %46, %48 : vector<16x128xf32>
      %50 = vector.shape_cast %49 : vector<16x128xf32> to vector<1x16x128xf32>
      %cst_28 = arith.constant dense<0.000000e+00> : vector<1xf32>
      %51 = vector.multi_reduction <add>, %50, %cst_28 [1, 2] : vector<1x16x128xf32> to vector<1xf32>
      %52 = vector.shape_cast %51 : vector<1xf32> to vector<1x1x1xf32>
      %53 = vector.extract %52[0, 0, 0] : f32 from vector<1x1x1xf32>
      %54 = vector.broadcast %53 : f32 to vector<1x1xf32>
      %c0_29 = arith.constant 0 : index
      %c0_30 = arith.constant 0 : index
      %c0_31 = arith.constant 0 : index
      %55 = vector.load %arg7[%c0_29, %c0_30, %c0_31] : memref<1x1x1xf32, #tpu.memory_space<vmem>>, vector<1x1x1xf32>
      %56 = vector.shape_cast %55 : vector<1x1x1xf32> to vector<1x1xf32>
      %57 = vector.shape_cast %54 : vector<1x1xf32> to vector<1x1x1xf32>
      tpu.vector_store %arg7[%c0_29, %c0_30, %c0_31], %57 {strides = array<i32>} : memref<1x1x1xf32, #tpu.memory_space<vmem>>, vector<1x1x1xf32>,
    } else {
    }
    return
  }
  func.func @transform_0(%arg0: i32, %arg1: i32) -> (i32, i32) {
    %c0_i32 = arith.constant 0 : i32
    return %arg0, %arg1 : i32, i32
  }
  func.func @transform_1(%arg0: i32, %arg1: i32) -> (i32, i32) {
    %c0_i32 = arith.constant 0 : i32
    return %arg0, %arg1 : i32, i32
  }
  func.func @transform_2(%arg0: i32, %arg1: i32) -> (i32, i32) {
    %c0_i32 = arith.constant 0 : i32
    %c0_i32_0 = arith.constant 0 : i32
    return %arg0, %c0_i32 : i32, i32
  }
  func.func @transform_3(%arg0: i32, %arg1: i32) -> (i32, i32) {
    %c0_i32 = arith.constant 0 : i32
    %c0_i32_0 = arith.constant 0 : i32
    return %arg0, %c0_i32 : i32, i32
  }
  func.func @transform_4(%arg0: i32, %arg1: i32) -> (i32, i32) {
    %c0_i32 = arith.constant 0 : i32
    %c0_i32_0 = arith.constant 0 : i32
    %c0_i32_1 = arith.constant 0 : i32
    return %c0_i32, %c0_i32_0 : i32, i32
  }
  func.func @transform_5(%arg0: i32, %arg1: i32) -> (i32, i32, i32) {
    %c0_i32 = arith.constant 0 : i32
    %c0_i32_0 = arith.constant 0 : i32
    %c0_i32_1 = arith.constant 0 : i32
    return %arg0, %c0_i32, %c0_i32_0 : i32, i32, i32
  }
}

</mosaic_0001>

<llo_original>
// kernel: tpu_custom_call.1
$region0: #{tpu_custom_call.1}
  #allocation0 [shape = 'u32[]', space=smem, size = 0x4, offset = 0x4, fixed_abs, tag = 'smem constant byte address 0x4 - core index']
  #allocation1 [shape = 'u32[144,128]{1,0:T(1,128)}', space=vmem, size = 0x12000, scoped, tag = 'internal scratch']
  #allocation2 [shape = 'f32[16,1]{1,0:T(8,128)}', space=vmem, size = 0x2000, scoped, tag = 'scratch operand']
  #allocation3 [shape = 'f32[16,1]{1,0:T(8,128)}', space=vmem, size = 0x2000, scoped, tag = 'scratch operand']
  #allocation4 [shape = 'f32[16,128]{1,0:T(8,128)}', space=vmem, size = 0x2000, scoped, tag = 'scratch operand']
  %s0 = inlined_call_operand.vmem [shape: f32[16,256], index: 0, kind: input, shape index: {}]
  %s1 = inlined_call_operand.hbm [shape: bf16[16,256], index: 1, kind: input, shape index: {}]
  %s2 = inlined_call_operand.vmem [shape: f32[16,1], index: 2, kind: input, shape index: {}]
  %s3 = inlined_call_operand.vmem [shape: f32[16,1], index: 3, kind: input, shape index: {}]
  %s4 = inlined_call_operand.hbm [shape: bf16[128,128], index: 4, kind: input, shape index: {}]
  %s5 = inlined_call_operand.hbm [shape: f32[1,1,1], index: 5, kind: output, shape index: {}]
  %s6 = sld [smem:[#allocation0]]
  $region107: #{tpu_custom_call.1} parent=0
    _
  %s8 = ssub.s32 1, %s6
  %s9 = scalar_select 0, %s8, %s6
  $region1: #{tpu_custom_call.1} parent=0
    #allocation5 [shape = 'u8[16384]{0}', space=vmem, size = 0x4000, scoped, tag = 'input window, operand 0']
    #allocation6 [shape = 'u8[8192]{0}', space=vmem, size = 0x2000, scoped, tag = 'input window, operand 1']
    #allocation7 [shape = 's32[2]{0}', space=sflag, size = 0x8, scoped, tag = 'scoped memory for tpu_custom_call.1']
    #allocation8 [shape = 's32[2]{0}', space=sflag, size = 0x8, scoped, tag = 'scoped memory for tpu_custom_call.1']
    #allocation9 [shape = 'u8[32768]{0}', space=vmem, size = 0x8000, scoped, tag = 'input window, operand 4, single buffered']
    #allocation10 [shape = 's32[1]{0}', space=sflag, size = 0x4, scoped, tag = 'scoped memory for tpu_custom_call.1']
    #allocation11 [shape = 'u8[512]{0}', space=vmem, size = 0x400, scoped, tag = 'output window, operand 0, single buffered']
    %10 = vsyncpa [#allocation7], 0
    %s11 = scalar_lea.sflag [#allocation7], 1
    %12 = vsyncpa %s11, 0
    %13 = vsyncpa [#allocation10], 0
    %14 = vsyncpa [#allocation8], 0
    loop: start=0, step=1, limit=4
    $region2: #{tpu_custom_call.1} parent=1 // loop_pre_header
      _
    $region3: #{tpu_custom_call.1} parent=1 // loop_header
      %s16 = sphi 0, %s20
      %p17 = scmp.ge.s32.totalorder %s16, 4
      %s23 = sphi 0, %s35
      %s24 = sphi 0, %s31
      %s25 = sphi 0, %s23
      %s26 = sphi 0, %s24
      %s27 = sphi 0, %s25
      %s28 = sphi 0, %s26
      %s40 = sphi 0, %s42
      %s43 = sphi 0, %s40
      %s44 = sphi 0, %s43
      %s60 = sphi 0, %s44
      %s68 = sphi 0, %s70
      %s71 = sphi 0, %s68
      %s72 = sphi 0, %s71
      %s88 = sphi 0, %s72
      %s94 = sphi 0, %s96
      %s97 = sphi 0, %s94
      %s98 = sphi 0, %s97
      %s114 = sphi 0, %s98
      %s120 = sphi 0, %s122
      %s123 = sphi 0, %s120
      %s124 = sphi 0, %s123
      %s140 = sphi 0, %s124
      %s144 = sphi 0, %s144
      %s146 = sphi 0, %s144
      %s147 = sphi 0, %s146
      %s161 = sphi 0, %s147
      %s167 = sphi 0, %s169
      %s170 = sphi 0, %s167
      %s171 = sphi 0, %s170
      %s187 = sphi 0, %s171
    $region4: #{tpu_custom_call.1} parent=1 // loop_header_branch
      %19 = sbr.rel (%p17) target = $region8
    $region5: #{tpu_custom_call.1} parent=1 // loop_body
      %s21 = ssub.s32 %s16, 1
      %s22 = ssub.s32 %s16, 2
      %s29 = sadd.s32 1, %s24
      %p30 = scmp.ge.s32.totalorder %s29, 2
      %s31 = scalar_select %p30, 0, %s29
      %s32 = sadd.s32 1, %s23
      %s33 = scalar_select %p30, %s32, %s23
      %p34 = scmp.ge.s32.totalorder %s33, 1
      %s35 = scalar_select %p34, 0, %s33
      %s36 = ssub.s32 %s23, %s35
      %s37 = ssub.s32 %s24, %s31
      %s38 = sor.u32 %s36, %s37
      %p39 = scmp.eq.s32.totalorder %s38, 0
      %s41 = sadd.s32 %s40, 1
      %s42 = scalar_select %p39, %s40, %s41
      %p45 = pneg %p39
      %p46 = scmp.eq.s32.totalorder %s16, 1
      %p47 = por %p45, %p46
      %p48 = scmp.ne.s32.totalorder %s40, %s43
      %p49 = scmp.eq.s32.totalorder %s16, 0
      %p50 = por %p48, %p49
      %p51 = scmp.ne.s32.totalorder %s40, %s43
      %p52 = scmp.eq.s32.totalorder %s21, 1
      %p53 = por %p51, %p52
      %p54 = scmp.ne.s32.totalorder %s43, %s44
      %p55 = scmp.eq.s32.totalorder %s21, 0
      %p56 = por %p54, %p55
      %p57 = scmp.ne.s32.totalorder %s43, %s44
      %p58 = scmp.eq.s32.totalorder %s22, 1
      %p59 = por %p57, %p58
      %p61 = scmp.ne.s32.totalorder %s44, %s60
      %p62 = scmp.eq.s32.totalorder %s22, 0
      %p63 = por %p61, %p62
      %s64 = ssub.s32 %s23, %s35
      %s65 = ssub.s32 %s24, %s31
      %s66 = sor.u32 %s64, %s65
      %p67 = scmp.eq.s32.totalorder %s66, 0
      %s69 = sadd.s32 %s68, 1
      %s70 = scalar_select %p67, %s68, %s69
      %p73 = pneg %p67
      %p74 = scmp.eq.s32.totalorder %s16, 1
      %p75 = por %p73, %p74
      %p76 = scmp.ne.s32.totalorder %s68, %s71
      %p77 = scmp.eq.s32.totalorder %s16, 0
      %p78 = por %p76, %p77
      %p79 = scmp.ne.s32.totalorder %s68, %s71
      %p80 = scmp.eq.s32.totalorder %s21, 1
      %p81 = por %p79, %p80
      %p82 = scmp.ne.s32.totalorder %s71, %s72
      %p83 = scmp.eq.s32.totalorder %s21, 0
      %p84 = por %p82, %p83
      %p85 = scmp.ne.s32.totalorder %s71, %s72
      %p86 = scmp.eq.s32.totalorder %s22, 1
      %p87 = por %p85, %p86
      %p89 = scmp.ne.s32.totalorder %s72, %s88
      %p90 = scmp.eq.s32.totalorder %s22, 0
      %p91 = por %p89, %p90
      %s92 = ssub.s32 %s23, %s35
      %p93 = scmp.eq.s32.totalorder %s92, 0
      %s95 = sadd.s32 %s94, 1
      %s96 = scalar_select %p93, %s94, %s95
      %p99 = pneg %p93
      %p100 = scmp.eq.s32.totalorder %s16, 1
      %p101 = por %p99, %p100
      %p102 = scmp.ne.s32.totalorder %s94, %s97
      %p103 = scmp.eq.s32.totalorder %s16, 0
      %p104 = por %p102, %p103
      %p105 = scmp.ne.s32.totalorder %s94, %s97
      %p106 = scmp.eq.s32.totalorder %s21, 1
      %p107 = por %p105, %p106
      %p108 = scmp.ne.s32.totalorder %s97, %s98
      %p109 = scmp.eq.s32.totalorder %s21, 0
      %p110 = por %p108, %p109
      %p111 = scmp.ne.s32.totalorder %s97, %s98
      %p112 = scmp.eq.s32.totalorder %s22, 1
      %p113 = por %p111, %p112
      %p115 = scmp.ne.s32.totalorder %s98, %s114
      %p116 = scmp.eq.s32.totalorder %s22, 0
      %p117 = por %p115, %p116
      %s118 = ssub.s32 %s23, %s35
      %p119 = scmp.eq.s32.totalorder %s118, 0
      %s121 = sadd.s32 %s120, 1
      %s122 = scalar_select %p119, %s120, %s121
      %p125 = pneg %p119
      %p126 = scmp.eq.s32.totalorder %s16, 1
      %p127 = por %p125, %p126
      %p128 = scmp.ne.s32.totalorder %s120, %s123
      %p129 = scmp.eq.s32.totalorder %s16, 0
      %p130 = por %p128, %p129
      %p131 = scmp.ne.s32.totalorder %s120, %s123
      %p132 = scmp.eq.s32.totalorder %s21, 1
      %p133 = por %p131, %p132
      %p134 = scmp.ne.s32.totalorder %s123, %s124
      %p135 = scmp.eq.s32.totalorder %s21, 0
      %p136 = por %p134, %p135
      %p137 = scmp.ne.s32.totalorder %s123, %s124
      %p138 = scmp.eq.s32.totalorder %s22, 1
      %p139 = por %p137, %p138
      %p141 = scmp.ne.s32.totalorder %s124, %s140
      %p142 = scmp.eq.s32.totalorder %s22, 0
      %p143 = por %p141, %p142
      %s145 = sadd.s32 %s144, 1
      %p148 = scmp.eq.s32.totalorder %s16, 1
      %p149 = scmp.ne.s32.totalorder %s144, %s146
      %p150 = scmp.eq.s32.totalorder %s16, 0
      %p151 = por %p149, %p150
      %p152 = scmp.ne.s32.totalorder %s144, %s146
      %p153 = scmp.eq.s32.totalorder %s21, 1
      %p154 = por %p152, %p153
      %p155 = scmp.ne.s32.totalorder %s146, %s147
      %p156 = scmp.eq.s32.totalorder %s21, 0
      %p157 = por %p155, %p156
      %p158 = scmp.ne.s32.totalorder %s146, %s147
      %p159 = scmp.eq.s32.totalorder %s22, 1
      %p160 = por %p158, %p159
      %p162 = scmp.ne.s32.totalorder %s147, %s161
      %p163 = scmp.eq.s32.totalorder %s22, 0
      %p164 = por %p162, %p163
      %s165 = ssub.s32 %s23, %s35
      %p166 = scmp.eq.s32.totalorder %s165, 0
      %s168 = sadd.s32 %s167, 1
      %s169 = scalar_select %p166, %s167, %s168
      %p172 = pneg %p166
      %p173 = scmp.eq.s32.totalorder %s16, 1
      %p174 = por %p172, %p173
      %p175 = scmp.ne.s32.totalorder %s167, %s170
      %p176 = scmp.eq.s32.totalorder %s16, 0
      %p177 = por %p175, %p176
      %p178 = scmp.ne.s32.totalorder %s167, %s170
      %p179 = scmp.eq.s32.totalorder %s21, 1
      %p180 = por %p178, %p179
      %p181 = scmp.ne.s32.totalorder %s170, %s171
      %p182 = scmp.eq.s32.totalorder %s21, 0
      %p183 = por %p181, %p182
      %p184 = scmp.ne.s32.totalorder %s170, %s171
      %p185 = scmp.eq.s32.totalorder %s22, 1
      %p186 = por %p184, %p185
      %p188 = scmp.ne.s32.totalorder %s171, %s187
      %p189 = scmp.eq.s32.totalorder %s22, 0
      %p190 = por %p188, %p189
      %p191 = scmp.le.s32.totalorder 1, %s16
      %p192 = scmp.lt.s32.totalorder %s16, 3
      %p193 = pnand %p191, %p192
      %p194 = pneg %p193
      // Predicated region
      $region9: #{tpu_custom_call.1} parent=5 // pred_check
        _
      $region10: #{tpu_custom_call.1} parent=5 // pred_check_branch
        %196 = sbr.rel (%p193) target = $region12
      $region11: #{tpu_custom_call.1} parent=5 // pred_region
        %s197 = ssub.s32 %s16, 1
        // Predicated region
        $region13: #{tpu_custom_call.1} parent=11 // pred_check
          %p198 = pneg %p110
        $region14: #{tpu_custom_call.1} parent=11 // pred_check_branch
          %200 = sbr.rel (%p198) target = $region16
        $region15: #{tpu_custom_call.1} parent=11 // pred_region
          %s201 = smul.u32 2, %s25
          %p202 = scmp.lt.s32.totalorder %s201, 1
          %s203 = scalar_select %p202, %s201, 1
          %s204 = smul.addr %s203, 8
          %s205 = scalar_lea.vmem %s2, %s204
          %s206 = smul.u32 2, %s25
        $region16: #{tpu_custom_call.1} parent=11 // pred_fallthru
          _
        // Predicated region
        $region17: #{tpu_custom_call.1} parent=11 // pred_check
          %p207 = pneg %p136
        $region18: #{tpu_custom_call.1} parent=11 // pred_check_branch
          %209 = sbr.rel (%p207) target = $region20
        $region19: #{tpu_custom_call.1} parent=11 // pred_region
          %s210 = smul.u32 2, %s25
          %p211 = scmp.lt.s32.totalorder %s210, 1
          %s212 = scalar_select %p211, %s210, 1
          %s213 = smul.addr %s212, 8
          %s214 = scalar_lea.vmem %s3, %s213
          %s215 = smul.u32 2, %s25
        $region20: #{tpu_custom_call.1} parent=11 // pred_fallthru
          _
        // Predicated region
        $region21: #{tpu_custom_call.1} parent=11 // pred_check
          %p216 = pneg %p157
        $region22: #{tpu_custom_call.1} parent=11 // pred_check_branch
          %218 = sbr.rel (%p216) target = $region24
        $region23: #{tpu_custom_call.1} parent=11 // pred_region
          %s220 = ssub.s32 1024, 1024
          %221 = vsyncadd [#allocation10], %s220
          %s222 = sshll.u32 [#allocation9], 4
          %s223 = int_to_ptr.vmem [resolvable:$true] %s222
          %228 = dma.hbm_to_vmem [thread:$0]  %s4, 1024, %s223, [#allocation10], 64, 64, 4
        $region24: #{tpu_custom_call.1} parent=11 // pred_fallthru
          _
      $region12: #{tpu_custom_call.1} parent=5 // pred_fallthru
        _
      %p229 = scmp.lt.s32.totalorder %s16, 2
      // Predicated region
      $region25: #{tpu_custom_call.1} parent=5 // pred_check
        %p230 = pneg %p229
      $region26: #{tpu_custom_call.1} parent=5 // pred_check_branch
        %232 = sbr.rel (%p230) target = $region28
      $region27: #{tpu_custom_call.1} parent=5 // pred_region
        // Predicated region
        $region29: #{tpu_custom_call.1} parent=27 // pred_check
          %p233 = pneg %p50
        $region30: #{tpu_custom_call.1} parent=27 // pred_check_branch
          %235 = sbr.rel (%p233) target = $region32
        $region31: #{tpu_custom_call.1} parent=27 // pred_region
          %s236 = sand.u32 %s40, 1
          %s237 = sand.u32 %s40, 1
          %s238 = smul.addr %s237, 16
          %s239 = scalar_lea.vmem [#allocation5], %s238
          %s240 = smul.u32 2, %s23
          %s241 = smul.addr %s240, 2
          %s242 = sadd.s32 %s24, %s241
          %s243 = smul.addr %s242, 8
          %s244 = scalar_lea.vmem %s0, %s243
          // Predicated region
          $region33: #{tpu_custom_call.1} parent=31 // pred_check
            _
          $region34: #{tpu_custom_call.1} parent=31 // pred_check_branch
            %246 = sbr.rel (0) target = $region36
          $region35: #{tpu_custom_call.1} parent=31 // pred_region
            // Predicated region
            $region37: #{tpu_custom_call.1} parent=35 // pred_check
              _
            $region38: #{tpu_custom_call.1} parent=35 // pred_check_branch
              %248 = sbr.rel (0) target = $region40
            $region39: #{tpu_custom_call.1} parent=35 // pred_region
              // Predicated region
              $region52: #{tpu_custom_call.1} parent=39 // pred_check
                _
              $region53: #{tpu_custom_call.1} parent=39 // pred_check_branch
                %266 = sbr.rel (0) target = $region55
              $region54: #{tpu_custom_call.1} parent=39 // pred_region
                loop: start=0, step=1, limit=1
                $region56: #{tpu_custom_call.1} parent=54 // loop_pre_header
                  _
                $region57: #{tpu_custom_call.1} parent=54 // loop_header
                  %s268 = sphi 0, %s272
                  %p269 = scmp.ge.s32.totalorder %s268, 1
                  %s273 = sphi %s244, %s244
                  %s274 = sphi %s239, %s239
                $region58: #{tpu_custom_call.1} parent=54 // loop_header_branch
                  %271 = sbr.rel (%p269) target = $region62
                $region59: #{tpu_custom_call.1} parent=54 // loop_body
                  %v275 = vld [vmem:[%s273] sm:$0xff]
                  %276 = vst [vmem:[%s274] sm:$0xff] %v275
                  %v277 = vld [vmem:[%s273 + $0x10] sm:$0xff]
                  %278 = vst [vmem:[%s274 + $0x8] sm:$0xff] %v277
                $region60: #{tpu_custom_call.1} parent=54 // loop_footer
                  %s272 = sadd.s32 1, %s268
                $region61: #{tpu_custom_call.1} parent=54 // loop_footer_branch
                  %267 = sbr.rel target = $region57
                $region62: #{tpu_custom_call.1} parent=54 // loop_exit
                  _
              $region55: #{tpu_custom_call.1} parent=39 // pred_fallthru
                _
              // Predicated region
              $region63: #{tpu_custom_call.1} parent=39 // pred_check
                _
              $region64: #{tpu_custom_call.1} parent=39 // pred_check_branch
                %280 = sbr.rel target = $region66
              $region65: #{tpu_custom_call.1} parent=39 // pred_region
                _
              $region66: #{tpu_custom_call.1} parent=39 // pred_fallthru
                _
            $region40: #{tpu_custom_call.1} parent=35 // pred_fallthru
              _
            // Predicated region
            $region41: #{tpu_custom_call.1} parent=35 // pred_check
              _
            $region42: #{tpu_custom_call.1} parent=35 // pred_check_branch
              %250 = sbr.rel target = $region44
            $region43: #{tpu_custom_call.1} parent=35 // pred_region
              %s252 = ssub.s32 256, 1
              loop: start=0, step=1, limit=1
              $region45: #{tpu_custom_call.1} parent=43 // loop_pre_header
                _
              $region46: #{tpu_custom_call.1} parent=43 // loop_header
                %s254 = sphi 0, %s258
                %p255 = scmp.ge.s32.totalorder %s254, 1
                %s259 = sphi %s244, %s244
                %s260 = sphi %s239, %s239
              $region47: #{tpu_custom_call.1} parent=43 // loop_header_branch
                %257 = sbr.rel (%p255) target = $region51
              $region48: #{tpu_custom_call.1} parent=43 // loop_body
                %v261 = vld [vmem:[%s259] sm:%s252]
                %262 = vst [vmem:[%s260] sm:%s252] %v261
                %v263 = vld [vmem:[%s259 + $0x10] sm:%s252]
                %264 = vst [vmem:[%s260 + $0x8] sm:%s252] %v263
              $region49: #{tpu_custom_call.1} parent=43 // loop_footer
                %s258 = sadd.s32 1, %s254
              $region50: #{tpu_custom_call.1} parent=43 // loop_footer_branch
                %253 = sbr.rel target = $region46
              $region51: #{tpu_custom_call.1} parent=43 // loop_exit
                _
            $region44: #{tpu_custom_call.1} parent=35 // pred_fallthru
              _
          $region36: #{tpu_custom_call.1} parent=31 // pred_fallthru
            _
          %281 = vnop
        $region32: #{tpu_custom_call.1} parent=27 // pred_fallthru
          _
        // Predicated region
        $region67: #{tpu_custom_call.1} parent=27 // pred_check
          %p282 = pneg %p78
        $region68: #{tpu_custom_call.1} parent=27 // pred_check_branch
          %284 = sbr.rel (%p282) target = $region70
        $region69: #{tpu_custom_call.1} parent=27 // pred_region
          %s285 = sand.u32 %s68, 1
          %s286 = scalar_lea.sflag [#allocation7], %s285
          %s287 = sand.u32 %s68, 1
          %s288 = smul.addr %s287, 8
          %s289 = scalar_lea.vmem [#allocation6], %s288
          %s290 = smul.u32 2, %s23
          %s292 = ssub.s32 128, 128
          %293 = vsyncadd %s286, %s292
          %s294 = smul.addr %s290, 2
          %s295 = sadd.s32 %s24, %s294
          %s296 = smul.addr %s295, 64
          %s297 = scalar_lea.hbm %s1, %s296
          %s298 = sshll.u32 %s289, 4
          %s299 = int_to_ptr.vmem [resolvable:$true] %s298
          %304 = dma.hbm_to_vmem [thread:$0]  %s297, 128, %s299, %s286, 128, 64, 4
        $region70: #{tpu_custom_call.1} parent=27 // pred_fallthru
          _
      $region28: #{tpu_custom_call.1} parent=5 // pred_fallthru
        _
      %p305 = scmp.le.s32.totalorder 1, %s16
      %p306 = scmp.lt.s32.totalorder %s16, 3
      %p307 = pnand %p305, %p306
      %p308 = pneg %p307
      // Predicated region
      $region71: #{tpu_custom_call.1} parent=5 // pred_check
        _
      $region72: #{tpu_custom_call.1} parent=5 // pred_check_branch
        %310 = sbr.rel (%p307) target = $region74
      $region73: #{tpu_custom_call.1} parent=5 // pred_region
        %s311 = ssub.s32 %s16, 1
        %s312 = sand.u32 %s43, 1
        %s313 = sand.u32 %s43, 1
        %s314 = smul.addr %s313, 16
        %s315 = scalar_lea.vmem [#allocation5], %s314
        // Predicated region
        $region75: #{tpu_custom_call.1} parent=73 // pred_check
          %p316 = pneg %p56
        $region76: #{tpu_custom_call.1} parent=73 // pred_check_branch
          %318 = sbr.rel (%p316) target = $region78
        $region77: #{tpu_custom_call.1} parent=73 // pred_region
          _
        $region78: #{tpu_custom_call.1} parent=73 // pred_fallthru
          _
        %s319 = sand.u32 %s71, 1
        %s320 = scalar_lea.sflag [#allocation7], %s319
        %s321 = sand.u32 %s71, 1
        %s322 = smul.addr %s321, 8
        %s323 = scalar_lea.vmem [#allocation6], %s322
        // Predicated region
        $region79: #{tpu_custom_call.1} parent=73 // pred_check
          %p324 = pneg %p84
        $region80: #{tpu_custom_call.1} parent=73 // pred_check_branch
          %326 = sbr.rel (%p324) target = $region82
        $region81: #{tpu_custom_call.1} parent=73 // pred_region
          %327 = dma.done %s320, 128
        $region82: #{tpu_custom_call.1} parent=73 // pred_fallthru
          _
        // Predicated region
        $region83: #{tpu_custom_call.1} parent=73 // pred_check
          %p328 = pneg %p157
        $region84: #{tpu_custom_call.1} parent=73 // pred_check_branch
          %330 = sbr.rel (%p328) target = $region86
        $region85: #{tpu_custom_call.1} parent=73 // pred_region
          %331 = dma.done [#allocation10], 1024
        $region86: #{tpu_custom_call.1} parent=73 // pred_fallthru
          _
        %s332 = sand.u32 %s43, 1
        %s333 = sand.u32 %s43, 1
        %s334 = smul.addr %s333, 16
        %s335 = scalar_lea.vmem [#allocation5], %s334
        %p336 = pneg %p56
        %p337 = pneg %p53
        %s338 = sand.u32 %s71, 1
        %s339 = scalar_lea.sflag [#allocation7], %s338
        %s340 = sand.u32 %s71, 1
        %s341 = smul.addr %s340, 8
        %s342 = scalar_lea.vmem [#allocation6], %s341
        %p343 = pneg %p84
        %p344 = pneg %p81
        %s345 = smul.u32 2, %s25
        %p346 = scmp.lt.s32.totalorder %s345, 1
        %s347 = scalar_select %p346, %s345, 1
        %s348 = smul.addr %s347, 8
        %s349 = scalar_lea.vmem %s2, %s348
        %p350 = pneg %p110
        %p351 = pneg %p107
        %s352 = smul.u32 2, %s25
        %p353 = scmp.lt.s32.totalorder %s352, 1
        %s354 = scalar_select %p353, %s352, 1
        %s355 = smul.addr %s354, 8
        %s356 = scalar_lea.vmem %s3, %s355
        %p357 = pneg %p136
        %p358 = pneg %p133
        %p359 = pneg %p157
        %p360 = pneg %p154
        %p361 = pneg %p183
        %p362 = pneg %p180
        %s363 = smul.u32 2, %s25
        %s364 = smul.u32 2, %s25
        %s365 = smul.u32 2, %s25
        %p366 = scmp.lt.s32.totalorder %s365, 1
        %s367 = scalar_select %p366, %s365, 1
        %s368 = smul.addr %s367, 8
        %s369 = scalar_lea.vmem %s2, %s368
        %s370 = smul.u32 2, %s25
        %s371 = smul.u32 2, %s25
        %p372 = scmp.lt.s32.totalorder %s371, 1
        %s373 = scalar_select %p372, %s371, 1
        %s374 = smul.addr %s373, 8
        %s375 = scalar_lea.vmem %s3, %s374
        %s376 = smul.u32 2, %s25
        %p378 = scmp.eq.s32.totalorder %s26, 0
        // Predicated region
        $region87: #{tpu_custom_call.1} parent=73 // pred_check
          %p379 = pneg %p378
        $region88: #{tpu_custom_call.1} parent=73 // pred_check_branch
          %381 = sbr.rel (%p379) target = $region90
        $region89: #{tpu_custom_call.1} parent=73 // pred_region
          %vm382 = vcmask 7168
          %383 = vst.msk [vmem:[#allocation2] sm:$0xff] %vm382, 0.0
          %384 = vst.msk [vmem:[#allocation2 + $0x8] sm:$0xff] %vm382, 0.0
          %385 = vst.msk [vmem:[#allocation3] sm:$0xff] %vm382, 0.0
          %386 = vst.msk [vmem:[#allocation3 + $0x8] sm:$0xff] %vm382, 0.0
          %387 = vst [vmem:[#allocation4] sm:$0xff] 0.0
          %388 = vst [vmem:[#allocation4 + $0x8] sm:$0xff] 0.0
        $region90: #{tpu_custom_call.1} parent=73 // pred_fallthru
          _
        %v389 = vld [vmem:[%s315] sm:$0xff]
        %v390 = vld [vmem:[%s315 + $0x8] sm:$0xff]
        %v391 = vld [vmem:[%s323] sm:$0xf]
        %v392 = vld [vmem:[%s323 + $0x4] sm:$0xf]
        %v393 = vld [vmem:[%s369] sm:$0xff]
        %v394 = vld [vmem:[%s369 + $0x8] sm:$0xff]
        %v395 = vld [vmem:[#allocation9] sm:$0xf]
        %v396 = vld [vmem:[#allocation9 + $0x4] sm:$0xf]
        %v397 = vld [vmem:[#allocation9 + $0x8] sm:$0xf]
        %v398 = vld [vmem:[#allocation9 + $0xc] sm:$0xf]
        %v399 = vld [vmem:[#allocation9 + $0x10] sm:$0xf]
        %v400 = vld [vmem:[#allocation9 + $0x14] sm:$0xf]
        %v401 = vld [vmem:[#allocation9 + $0x18] sm:$0xf]
        %v402 = vld [vmem:[#allocation9 + $0x1c] sm:$0xf]
        %v403 = vld [vmem:[#allocation9 + $0x20] sm:$0xf]
        %v404 = vld [vmem:[#allocation9 + $0x24] sm:$0xf]
        %v405 = vld [vmem:[#allocation9 + $0x28] sm:$0xf]
        %v406 = vld [vmem:[#allocation9 + $0x2c] sm:$0xf]
        %v407 = vld [vmem:[#allocation9 + $0x30] sm:$0xf]
        %v408 = vld [vmem:[#allocation9 + $0x34] sm:$0xf]
        %v409 = vld [vmem:[#allocation9 + $0x38] sm:$0xf]
        %v410 = vld [vmem:[#allocation9 + $0x3c] sm:$0xf]
        %v411 = vld [vmem:[#allocation2] sm:$0xff]
        %v412 = vld [vmem:[#allocation2 + $0x8] sm:$0xff]
        %414 = vset.pattern.permute.xlu0 0
        %415 = vperm.xlu0 %414, %v411
        %v416 = vpop.permute.xlu0 %415
        %419 = vset.pattern.permute.xlu0 0
        %420 = vperm.xlu0 %419, %v412
        %v421 = vpop.permute.xlu0 %420
        %v425 = vunpack.c.l.b16 %v391
        %v426 = vunpack.c.l.b16 %v392
        %v427 = vpack.c.b16 %v426, %v425
        %v445 = vunpack.c.l.b16 %v395
        %v446 = vunpack.c.l.b16 %v396
        %v447 = vunpack.c.l.b16 %v397
        %v448 = vunpack.c.l.b16 %v398
        %v449 = vunpack.c.l.b16 %v399
        %v450 = vunpack.c.l.b16 %v400
        %v451 = vunpack.c.l.b16 %v401
        %v452 = vunpack.c.l.b16 %v402
        %v453 = vunpack.c.l.b16 %v403
        %v454 = vunpack.c.l.b16 %v404
        %v455 = vunpack.c.l.b16 %v405
        %v456 = vunpack.c.l.b16 %v406
        %v457 = vunpack.c.l.b16 %v407
        %v458 = vunpack.c.l.b16 %v408
        %v459 = vunpack.c.l.b16 %v409
        %v460 = vunpack.c.l.b16 %v410
        %v461 = vpack.c.b16 %v446, %v445
        %v462 = vpack.c.b16 %v448, %v447
        %v463 = vpack.c.b16 %v450, %v449
        %v464 = vpack.c.b16 %v452, %v451
        %v465 = vpack.c.b16 %v454, %v453
        %v466 = vpack.c.b16 %v456, %v455
        %v467 = vpack.c.b16 %v458, %v457
        %v468 = vpack.c.b16 %v460, %v459
        %477 = vmatprep.subr.bf16.mxu0 0
        %478 = vmatpush1.bf16.msra.mxu0 %v468
        %479 = vmatprep.subr.bf16.mxu0 0
        %480 = vmatpush1.bf16.msra.mxu0 %v467
        %481 = vmatprep.subr.bf16.mxu0 0
        %482 = vmatpush1.bf16.msra.mxu0 %v466
        %483 = vmatprep.subr.bf16.mxu0 0
        %484 = vmatpush1.bf16.msra.mxu0 %v465
        %485 = vmatprep.subr.bf16.mxu0 0
        %486 = vmatpush1.bf16.msra.mxu0 %v464
        %487 = vmatprep.subr.bf16.mxu0 0
        %488 = vmatpush1.bf16.msra.mxu0 %v463
        %489 = vmatprep.subr.bf16.mxu0 0
        %490 = vmatpush1.bf16.msra.mxu0 %v462
        %491 = vmatprep.subr.bf16.mxu0 0
        %492 = vmatpush1.bf16.msra.mxu0 %v461
        %493 = vmatprep.subr.bf16.mxu0 0
        %494 = vmatpush2.bf16.msra.mxu0 0
        %495 = vmatprep.subr.bf16.mxu0 0
        %496 = vmatpush2.bf16.msra.mxu0 0
        %497 = vmatprep.subr.bf16.mxu0 0
        %498 = vmatpush2.bf16.msra.mxu0 0
        %499 = vmatprep.subr.bf16.mxu0 0
        %500 = vmatpush2.bf16.msra.mxu0 0
        %501 = vmatprep.subr.bf16.mxu0 0
        %502 = vmatpush2.bf16.msra.mxu0 0
        %503 = vmatprep.subr.bf16.mxu0 0
        %504 = vmatpush2.bf16.msra.mxu0 0
        %505 = vmatprep.subr.bf16.mxu0 0
        %506 = vmatpush2.bf16.msra.mxu0 0
        %507 = vmatprep.subr.bf16.mxu0 0
        %508 = vmatpush2.bf16.msra.mxu0 0
        %509 = vmatprep.mubr.bf16.mxu0 0
        %510 = vmatmul.mubr.bf16.gmra.mxu0 %v427
        %v511 = vpop.f32.mrf.mxu0
        %v512 = vadd.f32 %v416, %v511
        %v513 = vpop.f32.mrf.mxu0
        %v514 = vpop.f32.mrf.mxu0
        %v515 = vadd.f32 %v421, %v514
        %v516 = vpop.f32.mrf.mxu0
        %517 = vdwg.mxu0
        %v518 = vlaneseq
        %v519 = vand.u32 %v518, 127
        %s520 = smul.u32 %s26, 128
        %v521 = vstv %s520
        %v522 = vadd.s32 %v521, %v519
        %v523 = vadd.s32 %v522, 1
        %v524 = vcvt.s32.f32 %v523
        %526 = vset.pattern.permute.xlu0 0
        %527 = vperm.xlu0 %526, %v393
        %v528 = vpop.permute.xlu0 %527
        %531 = vset.pattern.permute.xlu0 0
        %532 = vperm.xlu0 %531, %v394
        %v533 = vpop.permute.xlu0 %532
        %v535 = vadd.f32 %v528, %v524
        %v536 = vadd.f32 %v533, %v524
        %v537 = vsub.f32 %v535, %v512
        %v538 = vsub.f32 %v536, %v515
        %v539 = vrcp.pop %v537
        %v540 = vrcp.pop %v538
        %v541 = vmul.f32 %v524, %v539
        %v542 = vmul.f32 %v524, %v540
        %543 = vrot.lane.b32.xlu0 %v541, 1
        %v544 = vpop.permute.xlu0 %543
        %545 = vrot.lane.b32.xlu0 %v542, 1
        %v546 = vpop.permute.xlu0 %545
        %vm547 = vcmp.eq.s32.totalorder %v519, 0
        %v548 = vld [vmem:[#allocation3] sm:$0xff]
        %v549 = vld [vmem:[#allocation3 + $0x8] sm:$0xff]
        %v550 = vsel %vm547, 1, 0
        %vm551 = vcmp.eq.s32.totalorder %v550, 1
        %553 = vset.pattern.permute.xlu0 0
        %554 = vperm.xlu0 %553, %v548
        %v555 = vpop.permute.xlu0 %554
        %558 = vset.pattern.permute.xlu0 0
        %559 = vperm.xlu0 %558, %v549
        %v560 = vpop.permute.xlu0 %559
        %v562 = vsel %vm551, %v555, %v544
        %v563 = vsel %vm551, %v560, %v546
        %v564 = vsub.f32 %v541, %v562
        %v565 = vsub.f32 %v542, %v563
        %v566 = vld [vmem:[#allocation4] sm:$0xff]
        %v567 = vld [vmem:[#allocation4 + $0x8] sm:$0xff]
        %v568 = vmul.f32 %v389, %v564
        %v569 = vmul.f32 %v390, %v565
        %v570 = vadd.f32 %v566, %v568
        %v571 = vadd.f32 %v567, %v569
        %572 = vst [vmem:[#allocation4] sm:$0xff] %v570
        %573 = vst [vmem:[#allocation4 + $0x8] sm:$0xff] %v571
        %576 = vrot.lane.b32.xlu0 %v512, 1
        %v577 = vpop.permute.xlu0 %576
        %578 = vrot.lane.b32.xlu0 %v515, 1
        %v579 = vpop.permute.xlu0 %578
        %vm582 = vcmask 7168
        %583 = vst.msk [vmem:[#allocation2] sm:$0xff] %vm582, %v577
        %584 = vst.msk [vmem:[#allocation2 + $0x8] sm:$0xff] %vm582, %v579
        %587 = vrot.lane.b32.xlu0 %v541, 1
        %v588 = vpop.permute.xlu0 %587
        %589 = vrot.lane.b32.xlu0 %v542, 1
        %v590 = vpop.permute.xlu0 %589
        %593 = vst.msk [vmem:[#allocation3] sm:$0xff] %vm582, %v588
        %594 = vst.msk [vmem:[#allocation3 + $0x8] sm:$0xff] %vm582, %v590
        %p595 = scmp.eq.s32.totalorder %s26, 1
        // Predicated region
        $region91: #{tpu_custom_call.1} parent=73 // pred_check
          %p596 = pneg %p595
        $region92: #{tpu_custom_call.1} parent=73 // pred_check_branch
          %598 = sbr.rel (%p596) target = $region94
        $region93: #{tpu_custom_call.1} parent=73 // pred_region
          %v599 = vld [vmem:[#allocation4] sm:$0xff]
          %v600 = vld [vmem:[#allocation4 + $0x8] sm:$0xff]
          %v601 = vld [vmem:[%s375] sm:$0xff]
          %v602 = vld [vmem:[%s375 + $0x8] sm:$0xff]
          %604 = vset.pattern.permute.xlu0 0
          %605 = vperm.xlu0 %604, %v601
          %v606 = vpop.permute.xlu0 %605
          %609 = vset.pattern.permute.xlu0 0
          %610 = vperm.xlu0 %609, %v602
          %v611 = vpop.permute.xlu0 %610
          %v613 = vmul.f32 %v599, %v606
          %v614 = vmul.f32 %v600, %v611
          %v615 = vadd.f32 %v613, %v614
          %616 = vadd.xlane.f32.xlu0 %v615
          %v617 = vpop.xlane.xlu0 %616
          %v618 = vrot.slane %v617, 4
          %v619 = vadd.f32 %v617, %v618
          %v620 = vrot.slane %v619, 2
          %v621 = vadd.f32 %v619, %v620
          %v622 = vrot.slane %v621, 1
          %v623 = vadd.f32 %v621, %v622
          %s624 = vtos %v623
          %v625 = vstv %s624
          %vm626 = vcmask 0
          %627 = vst.msk [vmem:[#allocation11] sm:$0x1] %vm626, %v625
        $region94: #{tpu_custom_call.1} parent=73 // pred_fallthru
          _
        // Predicated region
        $region95: #{tpu_custom_call.1} parent=73 // pred_check
          %p628 = pneg %p180
        $region96: #{tpu_custom_call.1} parent=73 // pred_check_branch
          %630 = sbr.rel (%p628) target = $region98
        $region97: #{tpu_custom_call.1} parent=73 // pred_region
          %s632 = ssub.s32 16, 16
          %633 = vsyncadd [#allocation8], %s632
          %s634 = smul.addr %s25, 16
          %s635 = scalar_lea.hbm %s5, %s634
          %s637 = sshll.u32 [#allocation11], 4
          %s638 = int_to_ptr.vmem [resolvable:$true] %s637
          %640 = dma.vmem_to_hbm [thread:$0]  %s638, 16, %s635, [#allocation8]
        $region98: #{tpu_custom_call.1} parent=73 // pred_fallthru
          _
        // Predicated region
        $region99: #{tpu_custom_call.1} parent=73 // pred_check
          %p641 = pneg %p180
        $region100: #{tpu_custom_call.1} parent=73 // pred_check_branch
          %643 = sbr.rel (%p641) target = $region102
        $region101: #{tpu_custom_call.1} parent=73 // pred_region
          %644 = dma.done [#allocation8], 16
        $region102: #{tpu_custom_call.1} parent=73 // pred_fallthru
          _
      $region74: #{tpu_custom_call.1} parent=5 // pred_fallthru
        _
      %p645 = scmp.le.s32.totalorder 2, %s16
      // Predicated region
      $region103: #{tpu_custom_call.1} parent=5 // pred_check
        %p646 = pneg %p645
      $region104: #{tpu_custom_call.1} parent=5 // pred_check_branch
        %648 = sbr.rel (%p646) target = $region106
      $region105: #{tpu_custom_call.1} parent=5 // pred_region
        %s649 = ssub.s32 %s16, 2
      $region106: #{tpu_custom_call.1} parent=5 // pred_fallthru
        _
    $region6: #{tpu_custom_call.1} parent=1 // loop_footer
      %s20 = sadd.s32 1, %s16
    $region7: #{tpu_custom_call.1} parent=1 // loop_footer_branch
      %15 = sbr.rel target = $region3
    $region8: #{tpu_custom_call.1} parent=1 // loop_exit
      _
    %650 = vsyncpa [#allocation7], 1
    %s651 = scalar_lea.sflag [#allocation7], 1
    %652 = vsyncpa %s651, 1
    %653 = vsyncpa [#allocation10], 1
    %654 = vsyncpa [#allocation8], 1
    %s655 = scalar_lea.sflag [#allocation8], 1
    %656 = vsyncpa %s655, 1

</llo_original>
